<compile_context>
chip_gen: v7x
topology: tpu7x:2x2x1
jax: 0.10.0
libtpu: 0.0.40
codegen_flags: <defaults>
</compile_context>

<pallas_src>
import functools

import jax
import jax.numpy as jnp
from jax.experimental import pallas as pl
from jax.experimental.pallas import tpu as pltpu

# ----------------------------------------------------------------------------
# Config (plays the role of update_me_essentials(self, data_info, stride))
# ----------------------------------------------------------------------------
LIDAR_RANGE = (-8.0, -8.0, -3.0, 8.0, 8.0, 1.0)   # x_min, y_min, z_min, x_max, y_max, z_max
VOXEL_SIZE = (0.2, 0.2)
STRIDE = 2
KERNEL = 3
VAR0 = (0.1, 0.1)
# Guard (review correctness concern): masked/padded lanes rely on var + VAR0 > 0
# so the approx reciprocal never sees 0 (inf * 0 -> NaN otherwise).
assert VAR0[0] > 0.0 and VAR0[1] > 0.0, "var0 must be > 0"

RES = (VOXEL_SIZE[0] * STRIDE, VOXEL_SIZE[1] * STRIDE)
SIZE_X = int(round((LIDAR_RANGE[3] - LIDAR_RANGE[0]) / RES[0]))
SIZE_Y = int(round((LIDAR_RANGE[4] - LIDAR_RANGE[1]) / RES[1]))
OFFSET_SZ_X = int(round(LIDAR_RANGE[0] / RES[0]))
OFFSET_SZ_Y = int(round(LIDAR_RANGE[1] / RES[1]))

_k = jnp.arange(KERNEL, dtype=jnp.int32) - KERNEL // 2
NBRS = jnp.stack(jnp.meshgrid(_k, _k, indexing="ij"), axis=-1).reshape(-1, 2)   # (n_nbrs, 2)
N_NBRS = int(NBRS.shape[0])

PAD_WIDTH = 2

# Below this many (query, neighbor) pairs, do the weighting in XLA (it fuses
# into the gather); a pallas_call would be pure fixed overhead.
SMALL_P_THRESHOLD = 8192


def _round_up(x, m):
    return ((x + m - 1) // m) * m


def _cdiv(a, b):
    return -(-a // b)


def _tpu_lane_target():
    """HBM-bandwidth-aware lane-tile target + megacore flag, per TPU generation.

    Each grid step moves ~(20 B in + 8 B out) per lane; targets keep the
    per-step DMA at ~1-4 MiB so the ~0.35us step overhead stays <10-15%.
    """
    try:
        kind = jax.devices()[0].device_kind.lower()
    except Exception:  # pragma: no cover - non-TPU fallback
        kind = ""
    if "v7" in kind:
        return 65536, True     # ~3.2 TB/s per TC, 2 TensorCores -> even multi-step grid
    if "v6" in kind:
        return 32768, False
    if "v5" in kind:
        return 16384, False
    return 32768, False


_LANE_TARGET, _MULTI_CORE = _tpu_lane_target()


# ----------------------------------------------------------------------------
# Plain-JAX helpers (glue), mirroring the torch utilities exactly
# ----------------------------------------------------------------------------
def indices2metric(indices, voxel_size):
    """Voxel indices -> voxel center in meters (batch column untouched)."""
    coor = indices.astype(jnp.float32)
    xy = (coor[:, 1:3] + 0.5) * jnp.asarray(voxel_size, jnp.float32)[None, :]
    return jnp.concatenate([coor[:, :1], xy], axis=1)


def metric2indices(coor, voxel_size):
    """Metric coords -> voxel indices, rounded towards floor."""
    xy = coor[:, 1:3] / jnp.asarray(voxel_size, jnp.float32)[None, :]
    out = jnp.concatenate([coor[:, :1].astype(jnp.float32), xy], axis=1)
    return jnp.floor(out).astype(jnp.int32)


def coor_to_indices(coor):
    """coor (int) -> stride-grid indices; trunc matches torch's long-cast assign."""
    c = coor.astype(jnp.float32)
    ix = jnp.trunc(c[:, 1] / STRIDE - OFFSET_SZ_X)
    iy = jnp.trunc(c[:, 2] / STRIDE - OFFSET_SZ_Y)
    return jnp.stack([c[:, 0], ix, iy], axis=1).astype(jnp.int32)


def get_nbr_mapping(query_pos, value_pos, n_batches):
    q = query_pos.at[:, 1:3].add(PAD_WIDTH)
    v = value_pos.at[:, 1:3].add(PAD_WIDTH)
    num_q = q.shape[0]
    num_v = v.shape[0]
    h = SIZE_X + 2 * PAD_WIDTH
    w = SIZE_Y + 2 * PAD_WIDTH

    value_map = -jnp.ones((n_batches, h, w), jnp.int32)
    value_map = value_map.at[v[:, 0], v[:, 1], v[:, 2]].set(
        jnp.arange(num_v, dtype=jnp.int32))

    nbr_xy = q[:, None, 1:3] + NBRS[None, :, :]                       # (Q, n, 2)
    nbr_b = jnp.broadcast_to(q[:, None, 0:1], (num_q, N_NBRS, 1))
    qn = jnp.concatenate([nbr_b, nbr_xy], axis=-1).reshape(-1, 3)     # (Q*n, 3)
    # TODO(synk): the reference asserts every padded neighbor index is in-bounds;
    # with pad_width=2 and |offset|<=1 this always holds for in-range queries.

    q_inds = jnp.repeat(jnp.arange(num_q, dtype=jnp.int32), N_NBRS)
    v_inds = value_map[qn[:, 0], qn[:, 1], qn[:, 2]]
    mask = jnp.logical_and(q_inds >= 0, v_inds >= 0)
    return q_inds, v_inds, mask


# ----------------------------------------------------------------------------
# Pallas kernel: weighted Mahalanobis evidence (the elementwise hot path)
#
# ev_slab  (bf16, 6 x P): [evi0*mask, evi1*mask, v00, v10, v01, v11]
# dxy_slab (f32 , 2 x P): [dx, dy]                (kept f32 for accuracy)
# out      (f32 , 2 x P): evidence per class
# ----------------------------------------------------------------------------
def _gev_kernel(ev_ref, dxy_ref, out_ref, *, var0x, var0y):
    ev = ev_ref[...].astype(jnp.float32)                      # (6, tp); f32 math (v5e-safe)
    dxy = dxy_ref[...]                                        # (2, tp) f32
    evi = ev[0:2, :]                                          # mask already folded in
    # EUP approx reciprocal (free slot) instead of VALU divides; var + var0 > 0.
    inv_vx = pl.reciprocal(ev[2:4, :] + var0x, approx=True)   # (2, tp) class-major
    inv_vy = pl.reciprocal(ev[4:6, :] + var0y, approx=True)   # (2, tp)
    dx2 = dxy[0:1, :] * dxy[0:1, :]                           # (1, tp)
    dy2 = dxy[1:2, :] * dxy[1:2, :]
    maha = dx2 * inv_vx + dy2 * inv_vy                        # (2, tp), sublane bcast
    # Exactly 3 transcendentals total (2 rcp + 1 exp); single lane-dense store.
    out_ref[...] = (jnp.exp(-0.5 * maha) * evi).astype(out_ref.dtype)


def _choose_tp(p_total):
    """Lane tile: ~_LANE_TARGET lanes/step (1-4 MiB DMA/step), derived from
    cdiv(P, n_steps) so padding waste stays small; >= 2 even steps on v7x."""
    p128 = _round_up(max(p_total, 1), 128)
    n_steps = max(1, _cdiv(p128, _LANE_TARGET))
    if _MULTI_CORE:
        n_steps = max(2, n_steps)
        n_steps += n_steps % 2           # even shards for the 2 TensorCores
    tp = _round_up(_cdiv(p128, n_steps), 512)
    return max(128, tp)


def _mahalanobis_pallas(ev_slab, dxy_slab, *, tp):
    _, p_pad = ev_slab.shape
    n_steps = p_pad // tp
    kern = functools.partial(_gev_kernel, var0x=float(VAR0[0]), var0y=float(VAR0[1]))
    if n_steps >= 4:
        # DMA-bound with negligible compute: deeper input buffering keeps the
        # input stream saturated across the output writeback.
        ev_spec = pl.BlockSpec((6, tp), lambda i: (0, i), pipeline_mode=pl.Buffered(3))
        dxy_spec = pl.BlockSpec((2, tp), lambda i: (0, i), pipeline_mode=pl.Buffered(3))
    else:
        ev_spec = pl.BlockSpec((6, tp), lambda i: (0, i))
        dxy_spec = pl.BlockSpec((2, tp), lambda i: (0, i))
    return pl.pallas_call(
        kern,
        out_shape=jax.ShapeDtypeStruct((2, p_pad), jnp.float32),
        grid=(n_steps,),
        in_specs=[ev_spec, dxy_spec],
        out_specs=pl.BlockSpec((2, tp), lambda i: (0, i)),
        compiler_params=pltpu.CompilerParams(dimension_semantics=("parallel",)),
    )(ev_slab, dxy_slab)


# ----------------------------------------------------------------------------
# Full forward pass
# ----------------------------------------------------------------------------
@functools.partial(jax.jit, static_argnames=("batch_size", "use_pallas"))
def gevbev_decoder_forward(ref_pts, ctr_coor, ctr_reg, batch_size, use_pallas=None):
    """
    ref_pts : float32 (Q, 3)   (batch_idx, x, y) in meters
    ctr_coor: int32   (V, 3)   (batch_idx, x, y) voxel indices (stride multiples)
    ctr_reg : float32 (V, 6)   [evi0, evi1, v00, v01, v10, v11]
    returns : float32 (Q, n_nbrs, 2)
    """
    reg = jax.nn.relu(ctr_reg)                                # (V, 6)
    ctr_pts = indices2metric(ctr_coor, VOXEL_SIZE)            # (V, 3) float

    # Row-major per-cell table (V, 8): contiguous 32-byte rows -> TPU-friendly gather.
    # Columns: [evi0, evi1, v00, v10, v01, v11, ctr_x, ctr_y]  (class-major variances)
    table = jnp.stack([
        reg[:, 0], reg[:, 1],
        reg[:, 2], reg[:, 4],
        reg[:, 3], reg[:, 5],
        ctr_pts[:, 1], ctr_pts[:, 2],
    ], axis=1).astype(jnp.float32)                            # (V, 8)

    ctr_inds = coor_to_indices(ctr_coor)
    ref_coor = metric2indices(ref_pts, VOXEL_SIZE)
    ref_inds = coor_to_indices(ref_coor)
    _, v_inds, mask = get_nbr_mapping(ref_inds, ctr_inds, batch_size)

    num_q = ref_pts.shape[0]
    p_total = num_q * N_NBRS

    if use_pallas is None:
        use_pallas = p_total >= SMALL_P_THRESHOLD

    safe_v = jnp.where(mask, v_inds, 0)                       # (P,)
    mask_f = mask.astype(jnp.float32)
    ref_x = jnp.repeat(ref_pts[:, 1], N_NBRS)                 # query-major pair order
    ref_y = jnp.repeat(ref_pts[:, 2], N_NBRS)

    if not use_pallas:
        # Small-P fast path: the whole weighting fuses into the gather in XLA.
        g = jnp.take(table, safe_v, axis=0)                   # (P, 8) contiguous rows
        evi = g[:, 0:2] * mask_f[:, None]
        inv_vx = 1.0 / (g[:, 2:4] + VAR0[0])
        inv_vy = 1.0 / (g[:, 4:6] + VAR0[1])
        dx = (ref_x - g[:, 6])[:, None]
        dy = (ref_y - g[:, 7])[:, None]
        probs = jnp.exp(-0.5 * (dx * dx * inv_vx + dy * dy * inv_vy)) * evi
        return probs.reshape(num_q, N_NBRS, 2)

    # --- Pallas path ---
    tp = _choose_tp(p_total)
    p_pad = _round_up(p_total, tp)
    pad = p_pad - p_total

    safe_v = jnp.pad(safe_v, (0, pad))
    mask_f = jnp.pad(mask_f, (0, pad))
    ref_x = jnp.pad(ref_x, (0, pad))
    ref_y = jnp.pad(ref_y, (0, pad))

    g = jnp.take(table, safe_v, axis=0)                       # (P_pad, 8) row gather
    gt = g.T                                                  # single channels-first re-layout
    # bf16 evidence/variance slab (20 -> 12 B/pair input); dx/dy stay f32.
    ev_slab = jnp.concatenate(
        [gt[0:2] * mask_f[None, :], gt[2:6]], axis=0).astype(jnp.bfloat16)   # (6, P_pad)
    dxy_slab = jnp.stack([ref_x - gt[6], ref_y - gt[7]], axis=0)             # (2, P_pad) f32

    # TODO(synk): for very large P, fuse the gather into the kernel (scalar-prefetch
    # v_inds + (V,8) table resident in VMEM, or a dense padded-grid scatter) to drop
    # the slab materialization / extra HBM pass entirely.
    out_cf = _mahalanobis_pallas(ev_slab, dxy_slab, tp=tp)    # (2, P_pad)

    # Single small layout pass required by the module's (Q, n_nbrs, 2) contract.
    # TODO(synk): if the consumer accepts channels-first (2, Q, n_nbrs), return
    # out_cf[:, :p_total].reshape(2, num_q, N_NBRS) and skip this transpose.
    out = out_cf[:, :p_total].T.reshape(num_q, N_NBRS, 2)
    return out


# ----------------------------------------------------------------------------
# Demo
# ----------------------------------------------------------------------------
if __name__ == "__main__":
    key = jax.random.PRNGKey(0)
    k1, k2, k3, k4 = jax.random.split(key, 4)

    B = 2
    cells_per_batch = 300                      # sparse occupancy of the 40x40 stride grid
    n_cells = SIZE_X * SIZE_Y

    coors = []
    for b in range(B):
        kb = jax.random.fold_in(k1, b)
        flat = jax.random.choice(kb, n_cells, (cells_per_batch,), replace=False)
        gx = (flat // SIZE_Y).astype(jnp.int32)
        gy = (flat % SIZE_Y).astype(jnp.int32)
        cx = (gx + OFFSET_SZ_X) * STRIDE       # voxel coords (stride multiples)
        cy = (gy + OFFSET_SZ_Y) * STRIDE
        coors.append(jnp.stack([jnp.full_like(gx, b), cx, cy], axis=1))
    ctr_coor = jnp.concatenate(coors, axis=0).astype(jnp.int32)        # (V, 3)
    V = ctr_coor.shape[0]

    ctr_reg = jax.random.normal(k2, (V, 6), jnp.float32)               # (V, 6)

    Q = 50
    ref_b = jax.random.randint(k3, (Q,), 0, B).astype(jnp.float32)
    ref_xy = jax.random.uniform(k4, (Q, 2), jnp.float32, -7.5, 7.5)
    ref_pts = jnp.concatenate([ref_b[:, None], ref_xy], axis=1)        # (Q, 3)

    # Force the Pallas path (small demo P would otherwise take the XLA fast path)
    out = gevbev_decoder_forward(ref_pts, ctr_coor, ctr_reg, B, use_pallas=True)
    out = jax.block_until_ready(out)
    # Exact-f32 XLA path as correctness reference (approx recip + bf16 slab tolerance).
    ref = gevbev_decoder_forward(ref_pts, ctr_coor, ctr_reg, B, use_pallas=False)
    ref = jax.block_until_ready(ref)

    assert out.shape == (Q, N_NBRS, 2), out.shape
    assert bool(jnp.all(jnp.isfinite(out)))
    assert bool(jnp.allclose(out, ref, rtol=1e-1, atol=1e-2)), float(
        jnp.max(jnp.abs(out - ref)))
    print("KERNEL_OK")
</pallas_src>

<mosaic_0001>
module attributes {stable_mosaic.version = 11 : i64} {
  func.func @_gev_kernel(%arg0: i32, %arg1: memref<6x512xbf16, #tpu.memory_space<vmem>>, %arg2: memref<2x512xf32, #tpu.memory_space<vmem>>, %arg3: memref<2x512xf32, #tpu.memory_space<vmem>>) attributes {dimension_semantics = [#tpu.dimension_semantics<parallel>], iteration_bounds = array<i64: 1>, scalar_prefetch = 0 : i64, scratch_operands = 0 : i64, tpu.core_type = #tpu.core_type<tc>, window_params = [{transform_indices = @transform_0, window_bounds = array<i64: 6, 512>}, {transform_indices = @transform_1, window_bounds = array<i64: 2, 512>}, {transform_indices = @transform_2, window_bounds = array<i64: 2, 512>}]} {
    %c0 = arith.constant 0 : index
    %c0_0 = arith.constant 0 : index
    %0 = vector.load %arg1[%c0, %c0_0] : memref<6x512xbf16, #tpu.memory_space<vmem>>, vector<6x512xbf16>
    %1 = arith.extf %0 : vector<6x512xbf16> to vector<6x512xf32>
    %c0_1 = arith.constant 0 : index
    %c0_2 = arith.constant 0 : index
    %2 = vector.load %arg2[%c0_1, %c0_2] : memref<2x512xf32, #tpu.memory_space<vmem>>, vector<2x512xf32>
    %3 = vector.extract_strided_slice %1 {offsets = [0, 0], sizes = [2, 512], strides = [1, 1]} : vector<6x512xf32> to vector<2x512xf32>
    %4 = vector.extract_strided_slice %1 {offsets = [2, 0], sizes = [2, 512], strides = [1, 1]} : vector<6x512xf32> to vector<2x512xf32>
    %cst = arith.constant 1.000000e-01 : f32
    %5 = vector.broadcast %cst : f32 to vector<2x512xf32>
    %6 = arith.addf %4, %5 : vector<2x512xf32>
    %7 = tpu.reciprocal %6 {approx = true} : vector<2x512xf32> -> vector<2x512xf32>
    %8 = vector.extract_strided_slice %1 {offsets = [4, 0], sizes = [2, 512], strides = [1, 1]} : vector<6x512xf32> to vector<2x512xf32>
    %cst_3 = arith.constant 1.000000e-01 : f32
    %9 = vector.broadcast %cst_3 : f32 to vector<2x512xf32>
    %10 = arith.addf %8, %9 : vector<2x512xf32>
    %11 = tpu.reciprocal %10 {approx = true} : vector<2x512xf32> -> vector<2x512xf32>
    %12 = vector.extract_strided_slice %2 {offsets = [0, 0], sizes = [1, 512], strides = [1, 1]} : vector<2x512xf32> to vector<1x512xf32>
    %13 = vector.extract_strided_slice %2 {offsets = [0, 0], sizes = [1, 512], strides = [1, 1]} : vector<2x512xf32> to vector<1x512xf32>
    %14 = arith.mulf %12, %13 : vector<1x512xf32>
    %15 = vector.extract_strided_slice %2 {offsets = [1, 0], sizes = [1, 512], strides = [1, 1]} : vector<2x512xf32> to vector<1x512xf32>
    %16 = vector.extract_strided_slice %2 {offsets = [1, 0], sizes = [1, 512], strides = [1, 1]} : vector<2x512xf32> to vector<1x512xf32>
    %17 = arith.mulf %15, %16 : vector<1x512xf32>
    %18 = vector.broadcast %14 : vector<1x512xf32> to vector<2x512xf32>
    %19 = arith.mulf %18, %7 : vector<2x512xf32>
    %20 = vector.broadcast %17 : vector<1x512xf32> to vector<2x512xf32>
    %21 = arith.mulf %20, %11 : vector<2x512xf32>
    %22 = arith.addf %19, %21 : vector<2x512xf32>
    %cst_4 = arith.constant -5.000000e-01 : f32
    %23 = vector.broadcast %cst_4 : f32 to vector<2x512xf32>
    %24 = arith.mulf %23, %22 : vector<2x512xf32>
    %25 = math.exp %24 : vector<2x512xf32>
    %26 = arith.mulf %25, %3 : vector<2x512xf32>
    %c0_5 = arith.constant 0 : index
    %c0_6 = arith.constant 0 : index
    %27 = vector.load %arg3[%c0_5, %c0_6] : memref<2x512xf32, #tpu.memory_space<vmem>>, vector<2x512xf32>
    tpu.vector_store %arg3[%c0_5, %c0_6], %26 {strides = array<i32>} : memref<2x512xf32, #tpu.memory_space<vmem>>, vector<2x512xf32>,
    return
  }
  func.func @transform_0(%arg0: i32) -> (i32, i32) {
    %c0_i32 = arith.constant 0 : i32
    %c0_i32_0 = arith.constant 0 : i32
    return %c0_i32, %arg0 : i32, i32
  }
  func.func @transform_1(%arg0: i32) -> (i32, i32) {
    %c0_i32 = arith.constant 0 : i32
    %c0_i32_0 = arith.constant 0 : i32
    return %c0_i32, %arg0 : i32, i32
  }
  func.func @transform_2(%arg0: i32) -> (i32, i32) {
    %c0_i32 = arith.constant 0 : i32
    %c0_i32_0 = arith.constant 0 : i32
    return %c0_i32, %arg0 : i32, i32
  }
}

</mosaic_0001>

<llo_original>
// kernel: neg.1
$region0: #{neg.1}
  #allocation0 [shape = 's32[1]{0}', space=sflag, size = 0x4, scoped, tag = 'scoped memory for neg.1']
  %s0 = inlined_call_operand.<no memory space> [shape: s32[], index: 0, kind: input, shape index: {}]
  %s1 = inlined_call_operand.vmem [shape: s32[2,44,44], index: 1, kind: output, shape index: {}]
  %v2 = vstv %s0
  %3 = vst [vmem:[%s1] sm:$0x3] %v2
  %s4 = scalar_lea.vmem %s1, 2
  %5 = vst [vmem:[%s4] sm:$0x3] %v2
  %s6 = scalar_lea.vmem %s1, 4
  %7 = vst [vmem:[%s6] sm:$0x3] %v2
  %s8 = scalar_lea.vmem %s1, 6
  %9 = vst [vmem:[%s8] sm:$0x3] %v2
  %s10 = scalar_lea.vmem %s1, 8
  %11 = vst [vmem:[%s10] sm:$0x3] %v2
  %s12 = scalar_lea.vmem %s1, 10
  %13 = vst [vmem:[%s12] sm:$0x3] %v2
  %s14 = scalar_lea.vmem %s1, 12
  %15 = vst [vmem:[%s14] sm:$0x3] %v2
  %s16 = scalar_lea.vmem %s1, 14
  %17 = vst [vmem:[%s16] sm:$0x3] %v2
  %s18 = scalar_lea.vmem %s1, 16
  %19 = vst [vmem:[%s18] sm:$0x3] %v2
  %s20 = scalar_lea.vmem %s1, 18
  %21 = vst [vmem:[%s20] sm:$0x3] %v2
  %s22 = scalar_lea.vmem %s1, 20
  %23 = vst [vmem:[%s22] sm:$0x3] %v2
  %s24 = scalar_lea.vmem %s1, 22
  %25 = vst [vmem:[%s24] sm:$0x3] %v2
  %s26 = scalar_lea.vmem %s1, 24
  %27 = vst [vmem:[%s26] sm:$0x3] %v2
  %s28 = scalar_lea.vmem %s1, 26
  %29 = vst [vmem:[%s28] sm:$0x3] %v2
  %s30 = scalar_lea.vmem %s1, 28
  %31 = vst [vmem:[%s30] sm:$0x3] %v2
  %s32 = scalar_lea.vmem %s1, 30
  %33 = vst [vmem:[%s32] sm:$0x3] %v2
  %s34 = scalar_lea.vmem %s1, 32
  %35 = vst [vmem:[%s34] sm:$0x3] %v2
  %s36 = scalar_lea.vmem %s1, 34
  %37 = vst [vmem:[%s36] sm:$0x3] %v2
  %s38 = scalar_lea.vmem %s1, 36
  %39 = vst [vmem:[%s38] sm:$0x3] %v2
  %s40 = scalar_lea.vmem %s1, 38
  %41 = vst [vmem:[%s40] sm:$0x3] %v2
  %s42 = scalar_lea.vmem %s1, 40
  %43 = vst [vmem:[%s42] sm:$0x3] %v2
  %s44 = scalar_lea.vmem %s1, 42
  %45 = vst [vmem:[%s44] sm:$0x3] %v2
  %s46 = scalar_lea.vmem %s1, 44
  %47 = vst [vmem:[%s46] sm:$0x3] %v2
  %s48 = scalar_lea.vmem %s1, 46
  %49 = vst [vmem:[%s48] sm:$0x3] %v2
  %s50 = scalar_lea.vmem %s1, 48
  %51 = vst [vmem:[%s50] sm:$0x3] %v2
  %s52 = scalar_lea.vmem %s1, 50
  %53 = vst [vmem:[%s52] sm:$0x3] %v2
  %s54 = scalar_lea.vmem %s1, 52
  %55 = vst [vmem:[%s54] sm:$0x3] %v2
  %s56 = scalar_lea.vmem %s1, 54
  %57 = vst [vmem:[%s56] sm:$0x3] %v2
  %s58 = scalar_lea.vmem %s1, 56
  %59 = vst [vmem:[%s58] sm:$0x3] %v2
  %s60 = scalar_lea.vmem %s1, 58
  %61 = vst [vmem:[%s60] sm:$0x3] %v2
  %s62 = scalar_lea.vmem %s1, 60
  %63 = vst [vmem:[%s62] sm:$0x3] %v2
  %s64 = scalar_lea.vmem %s1, 62
  %65 = vst [vmem:[%s64] sm:$0x3] %v2
  %s66 = scalar_lea.vmem %s1, 64
  %67 = vst [vmem:[%s66] sm:$0x3] %v2
  %s68 = scalar_lea.vmem %s1, 66
  %69 = vst [vmem:[%s68] sm:$0x3] %v2
  %s70 = scalar_lea.vmem %s1, 68
  %71 = vst [vmem:[%s70] sm:$0x3] %v2
  %s72 = scalar_lea.vmem %s1, 70
  %73 = vst [vmem:[%s72] sm:$0x3] %v2
  %s74 = scalar_lea.vmem %s1, 72
  %75 = vst [vmem:[%s74] sm:$0x3] %v2
  %s76 = scalar_lea.vmem %s1, 74
  %77 = vst [vmem:[%s76] sm:$0x3] %v2
  %s78 = scalar_lea.vmem %s1, 76
  %79 = vst [vmem:[%s78] sm:$0x3] %v2
  %s80 = scalar_lea.vmem %s1, 78
  %81 = vst [vmem:[%s80] sm:$0x3] %v2
  %s82 = scalar_lea.vmem %s1, 80
  %83 = vst [vmem:[%s82] sm:$0x3] %v2
  %s84 = scalar_lea.vmem %s1, 82
  %85 = vst [vmem:[%s84] sm:$0x3] %v2
  %s86 = scalar_lea.vmem %s1, 84
  %87 = vst [vmem:[%s86] sm:$0x3] %v2
  %s88 = scalar_lea.vmem %s1, 86
  %89 = vst [vmem:[%s88] sm:$0x3] %v2

// kernel: gevbev_decoder_forward.1
$region0: #{gevbev_decoder_forward.1}
  #allocation0 [shape = 'u32[]', space=smem, size = 0x4, offset = 0x4, fixed_abs, tag = 'smem constant byte address 0x4 - core index']
  #allocation1 [shape = 'u32[144,128]{1,0:T(1,128)}', space=vmem, size = 0x12000, scoped, tag = 'internal scratch']
  %s0 = inlined_call_operand.vmem [shape: bf16[6,512], index: 0, kind: input, shape index: {}]
  %s1 = inlined_call_operand.vmem [shape: f32[2,512], index: 1, kind: input, shape index: {}]
  %s2 = inlined_call_operand.vmem [shape: f32[2,512], index: 2, kind: output, shape index: {}]
  %s3 = sld [smem:[#allocation0]]
  $region18: #{gevbev_decoder_forward.1} parent=0
    _
  %s5 = ssub.s32 1, %s3
  %s6 = scalar_select 0, %s5, %s3
  // Predicated region
  $region2: #{gevbev_decoder_forward.1} parent=0 // pred_check
    _
  $region3: #{gevbev_decoder_forward.1} parent=0 // pred_check_branch
    %8 = sbr.rel (0) target = $region5
  $region4: #{gevbev_decoder_forward.1} parent=0 // pred_region
    _
  $region5: #{gevbev_decoder_forward.1} parent=0 // pred_fallthru
    _
  // Predicated region
  $region6: #{gevbev_decoder_forward.1} parent=0 // pred_check
    _
  $region7: #{gevbev_decoder_forward.1} parent=0 // pred_check_branch
    %10 = sbr.rel (0) target = $region9
  $region8: #{gevbev_decoder_forward.1} parent=0 // pred_region
    _
  $region9: #{gevbev_decoder_forward.1} parent=0 // pred_fallthru
    _
  %v11 = vld [vmem:[%s0] sm:$0x77]
  %v12 = vld [vmem:[%s0 + $0x8] sm:$0x77]
  %v13 = vunpack.c.l.bf16 %v11
  %v14 = vunpack.c.h.bf16 %v11
  %v15 = vunpack.c.l.bf16 %v12
  %v16 = vunpack.c.h.bf16 %v12
  %v17 = vld [vmem:[%s1] sm:$0xff]
  %v18 = vadd.f32 %v13, 0.1
  %v19 = vadd.f32 %v14, 0.1
  %v20 = vadd.f32 %v15, 0.1
  %v21 = vadd.f32 %v16, 0.1
  %v22 = vrcp.pop %v18
  %v23 = vrcp.pop %v19
  %v24 = vrcp.pop %v20
  %v25 = vrcp.pop %v21
  %v26 = vmul.f32 %v17, %v17
  %v28 = vlaneseq
  %v29 = vshrl.u32 %v28, 7
  %v30 = vsub.s32 0, %v29
  %v31 = vrot.slane %v26, %v30
  %v32 = vlaneseq
  %v33 = vshrl.u32 %v32, 7
  %v34 = vsub.s32 2, %v33
  %v35 = vrot.slane %v26, %v34
  %v36 = vlaneseq
  %v37 = vshrl.u32 %v36, 7
  %v38 = vsub.s32 4, %v37
  %v39 = vrot.slane %v26, %v38
  %v40 = vlaneseq
  %v41 = vshrl.u32 %v40, 7
  %v42 = vsub.s32 6, %v41
  %v43 = vrot.slane %v26, %v42
  %v48 = vlaneseq
  %v49 = vshrl.u32 %v48, 7
  %v50 = vsub.s32 0, %v49
  %v51 = vrot.slane %v31, %v50
  %v52 = vlaneseq
  %v53 = vshrl.u32 %v52, 7
  %v54 = vsub.s32 0, %v53
  %v55 = vrot.slane %v35, %v54
  %v56 = vlaneseq
  %v57 = vshrl.u32 %v56, 7
  %v58 = vsub.s32 0, %v57
  %v59 = vrot.slane %v39, %v58
  %v60 = vlaneseq
  %v61 = vshrl.u32 %v60, 7
  %v62 = vsub.s32 0, %v61
  %v63 = vrot.slane %v43, %v62
  %v64 = vmul.f32 %v51, %v22
  %v65 = vmul.f32 %v55, %v23
  %v66 = vmul.f32 %v59, %v24
  %v67 = vmul.f32 %v63, %v25
  %v68 = vlaneseq
  %v69 = vshrl.u32 %v68, 7
  %v70 = vsub.s32 1, %v69
  %v71 = vrot.slane %v26, %v70
  %v72 = vlaneseq
  %v73 = vshrl.u32 %v72, 7
  %v74 = vsub.s32 3, %v73
  %v75 = vrot.slane %v26, %v74
  %v76 = vlaneseq
  %v77 = vshrl.u32 %v76, 7
  %v78 = vsub.s32 5, %v77
  %v79 = vrot.slane %v26, %v78
  %v80 = vlaneseq
  %v81 = vshrl.u32 %v80, 7
  %v82 = vsub.s32 7, %v81
  %v83 = vrot.slane %v26, %v82
  %v88 = vlaneseq
  %v89 = vshrl.u32 %v88, 7
  %v90 = vsub.s32 1, %v89
  %v91 = vrot.slane %v71, %v90
  %v92 = vlaneseq
  %v93 = vshrl.u32 %v92, 7
  %v94 = vsub.s32 1, %v93
  %v95 = vrot.slane %v75, %v94
  %v96 = vlaneseq
  %v97 = vshrl.u32 %v96, 7
  %v98 = vsub.s32 1, %v97
  %v99 = vrot.slane %v79, %v98
  %v100 = vlaneseq
  %v101 = vshrl.u32 %v100, 7
  %v102 = vsub.s32 1, %v101
  %v103 = vrot.slane %v83, %v102
  %v104 = vmul.f32 %v91, %v22
  %v105 = vmul.f32 %v95, %v23
  %v106 = vmul.f32 %v99, %v24
  %v107 = vmul.f32 %v103, %v25
  %v112 = vrot.slane %v104, 2
  %v113 = vrot.slane %v105, 2
  %v114 = vrot.slane %v106, 2
  %v115 = vrot.slane %v107, 2
  %v120 = vadd.f32 %v64, %v112
  %v121 = vadd.f32 %v65, %v113
  %v122 = vadd.f32 %v66, %v114
  %v123 = vadd.f32 %v67, %v115
  %v124 = vmul.f32 %v120, -0.5
  %v125 = vmul.f32 %v121, -0.5
  %v126 = vmul.f32 %v122, -0.5
  %v127 = vmul.f32 %v123, -0.5
  %v128 = vmul.f32 %v124, 1.442695
  %v129 = vpow.pop %v128
  %v130 = vmul.f32 %v125, 1.442695
  %v131 = vpow.pop %v130
  %v132 = vmul.f32 %v126, 1.442695
  %v133 = vpow.pop %v132
  %v134 = vmul.f32 %v127, 1.442695
  %v135 = vpow.pop %v134
  %v140 = vrot.slane %v13, 6
  %v141 = vrot.slane %v14, 6
  %v142 = vrot.slane %v15, 6
  %v143 = vrot.slane %v16, 6
  %v148 = vmul.f32 %v129, %v140
  %v149 = vmul.f32 %v131, %v141
  %v150 = vmul.f32 %v133, %v142
  %v151 = vmul.f32 %v135, %v143
  %v156 = vcombine.low %v148, %v149
  %v157 = vcombine.low %v150, %v151
  %v159 = vunpack.c.l.s4 1983009808
  %v160 = vunpack.c.0.s8 %v159
  %v161 = vlaneseq
  %v162 = vshrl.u32 %v161, 7
  %v163 = vsub.s32 %v160, %v162
  %v164 = vrot.slane %v156, %v163
  %v166 = vunpack.c.l.s4 1983009808
  %v167 = vunpack.c.0.s8 %v166
  %v168 = vlaneseq
  %v169 = vshrl.u32 %v168, 7
  %v170 = vsub.s32 %v167, %v169
  %v171 = vrot.slane %v157, %v170
  %v172 = vcombine.high %v164, %v171
  %174 = vst [vmem:[%s2] sm:$0xff] %v172
  // Predicated region
  $region10: #{gevbev_decoder_forward.1} parent=0 // pred_check
    _
  $region11: #{gevbev_decoder_forward.1} parent=0 // pred_check_branch
    %176 = sbr.rel (0) target = $region13
  $region12: #{gevbev_decoder_forward.1} parent=0 // pred_region
    _
  $region13: #{gevbev_decoder_forward.1} parent=0 // pred_fallthru
    _
  // Predicated region
  $region14: #{gevbev_decoder_forward.1} parent=0 // pred_check
    _
  $region15: #{gevbev_decoder_forward.1} parent=0 // pred_check_branch
    %178 = sbr.rel (0) target = $region17
  $region16: #{gevbev_decoder_forward.1} parent=0 // pred_region
    _
  $region17: #{gevbev_decoder_forward.1} parent=0 // pred_fallthru
    _

</llo_original>
